<compile_context>
chip_gen: v7x
topology: tpu7x:2x2x1
jax: 0.10.0
libtpu: 0.0.40
codegen_flags: <defaults>
</compile_context>

<pallas_src>
import jax
import jax.numpy as jnp
from jax.experimental import pallas as pl
from jax.experimental.pallas import tpu as pltpu

LANE = 128


def _round_up(n, m):
    return ((n + m - 1) // m) * m


def mlp_kernel(x_ref, w1_ref, b1_ref, w2_ref, b2_ref, w3_ref, b3_ref, o_ref):
    x = x_ref[...]  # (tb, 2) float32
    # fc1 + ReLU: K=2 is degenerate for the MXU -> two VPU broadcast-FMAs.
    h1 = x[:, 0:1] * w1_ref[0:1, :] + x[:, 1:2] * w1_ref[1:2, :] + b1_ref[...]
    h1 = jnp.maximum(h1, 0.0)
    # fc2 + ReLU: bf16 (or f32) weights on the MXU, f32 accumulation.
    h2 = jnp.dot(h1.astype(w2_ref.dtype), w2_ref[...],
                 preferred_element_type=jnp.float32)
    h2 = jnp.maximum(h2 + b2_ref[...], 0.0)
    # fc3: lane-dense (128-wide, zero-padded) output block, no activation.
    out = jnp.dot(h2.astype(w3_ref.dtype), w3_ref[...],
                  preferred_element_type=jnp.float32)
    o_ref[...] = (out + b3_ref[...]).astype(o_ref.dtype)


def net_forward(x, w1, b1, w2, b2, w3, b3, *, block_b=1024,
                weight_dtype=jnp.bfloat16):
    """Forward pass of Net. x: (B, 2) f32, weights stored (in, out)."""
    B, in_f = x.shape
    H = w1.shape[1]                 # 500
    O = w3.shape[1]                 # 2
    HP = _round_up(H, LANE)         # 512  (lane-aligned hidden dim)
    OP = _round_up(O, LANE)         # 128  (lane-dense output slab)
    f32 = jnp.float32

    # Zero-padding is numerically neutral: padded columns get zero weights and
    # zero bias, and the padded rows of the next layer's weights are zero.
    w1p = jnp.zeros((in_f, HP), f32).at[:, :H].set(w1.astype(f32))
    b1p = jnp.zeros((1, HP), f32).at[:, :H].set(jnp.reshape(b1, (1, H)).astype(f32))
    w2p = jnp.zeros((HP, HP), f32).at[:H, :H].set(w2.astype(f32)).astype(weight_dtype)
    b2p = jnp.zeros((1, HP), f32).at[:, :H].set(jnp.reshape(b2, (1, H)).astype(f32))
    w3p = jnp.zeros((HP, OP), f32).at[:H, :O].set(w3.astype(f32)).astype(weight_dtype)
    b3p = jnp.zeros((1, OP), f32).at[:, :O].set(jnp.reshape(b3, (1, O)).astype(f32))

    # Batch tile: multiple of 8 sublanes; pad B so the grid divides evenly.
    tb = max(8, _round_up(min(block_b, B), 8))
    Bp = _round_up(B, tb)
    xp = x.astype(f32)
    if Bp != B:
        xp = jnp.pad(xp, ((0, Bp - B), (0, 0)))

    wb = jnp.dtype(weight_dtype).itemsize
    cost = pl.CostEstimate(
        flops=2 * Bp * (in_f * HP + HP * HP + HP * OP),
        transcendentals=0,
        bytes_accessed=(xp.size * 4 + Bp * OP * 4
                        + w1p.size * 4 + b1p.size * 4 + b2p.size * 4 + b3p.size * 4
                        + w2p.size * wb + w3p.size * wb),
    )

    # Weights/biases stay VMEM-resident across batch tiles (constant block
    # index -> fetched once, not re-DMA'd per tile).
    def wspec(shape):
        return pl.BlockSpec(shape, lambda i: (0, 0))

    out_padded = pl.pallas_call(
        mlp_kernel,
        out_shape=jax.ShapeDtypeStruct((Bp, OP), jnp.float32),
        grid_spec=pltpu.PrefetchScalarGridSpec(
            num_scalar_prefetch=0,
            grid=(Bp // tb,),
            in_specs=[
                pl.BlockSpec((tb, in_f), lambda i: (i, 0)),
                wspec(w1p.shape), wspec(b1p.shape),
                wspec(w2p.shape), wspec(b2p.shape),
                wspec(w3p.shape), wspec(b3p.shape),
            ],
            out_specs=pl.BlockSpec((tb, OP), lambda i: (i, 0)),
        ),
        compiler_params=pltpu.CompilerParams(
            dimension_semantics=("parallel",),
            vmem_limit_bytes=16 << 20,
        ),
        cost_estimate=cost,
    )(xp, w1p, b1p, w2p, b2p, w3p, b3p)

    # Strip batch padding and the lane padding of the output slab.
    return out_padded[:B, :O]


def init_params(key):
    """Deterministic init mirroring the PyTorch layer shapes (weights (in,out))."""
    k1, k2, k3, k4, k5, k6 = jax.random.split(key, 6)

    def uniform(k, shape, fan_in):
        bound = 1.0 / (fan_in ** 0.5)
        return jax.random.uniform(k, shape, jnp.float32, -bound, bound)

    w1 = uniform(k1, (2, 500), 2)
    b1 = uniform(k2, (1, 500), 2)
    w2 = uniform(k3, (500, 500), 500)
    b2 = uniform(k4, (1, 500), 500)
    w3 = uniform(k5, (500, 2), 500)
    b3 = uniform(k6, (1, 2), 500)
    return w1, b1, w2, b2, w3, b3


if __name__ == "__main__":
    key = jax.random.PRNGKey(0)
    kx, kp = jax.random.split(key)

    B = 8
    x = jax.random.normal(kx, (B, 2), dtype=jnp.float32)
    params = init_params(kp)
    w1, b1, w2, b2, w3, b3 = params

    # Plain-JAX f32 reference (same math as the PyTorch forward).
    ref = jnp.maximum(x @ w1 + b1, 0.0)
    ref = jnp.maximum(ref @ w2 + b2, 0.0)
    ref = ref @ w3 + b3

    # Exact-precision path (f32 weights): tight semantic check.
    out_f32 = net_forward(x, *params, weight_dtype=jnp.float32)
    jax.block_until_ready(out_f32)
    assert out_f32.shape == (B, 2)
    assert jnp.allclose(out_f32, ref, atol=1e-4, rtol=1e-4)

    # Default performance path (bf16 weights, f32 accumulate): looser check.
    out = net_forward(x, *params)
    jax.block_until_ready(out)
    assert out.shape == (B, 2)
    assert jnp.allclose(out, ref, atol=2e-2, rtol=2e-2)

    print("KERNEL_OK")
</pallas_src>

<mosaic_0001>
module attributes {stable_mosaic.version = 11 : i64} {
  func.func @mlp_kernel(%arg0: i32, %arg1: memref<8x2xf32, #tpu.memory_space<vmem>>, %arg2: memref<2x512xf32, #tpu.memory_space<vmem>>, %arg3: memref<1x512xf32, #tpu.memory_space<vmem>>, %arg4: memref<512x512xf32, #tpu.memory_space<vmem>>, %arg5: memref<1x512xf32, #tpu.memory_space<vmem>>, %arg6: memref<512x128xf32, #tpu.memory_space<vmem>>, %arg7: memref<1x128xf32, #tpu.memory_space<vmem>>, %arg8: memref<8x128xf32, #tpu.memory_space<vmem>>) attributes {dimension_semantics = [#tpu.dimension_semantics<parallel>], iteration_bounds = array<i64: 1>, scalar_prefetch = 0 : i64, scratch_operands = 0 : i64, tpu.core_type = #tpu.core_type<tc>, window_params = [{transform_indices = @transform_0, window_bounds = array<i64: 8, 2>}, {pipeline_mode = #tpu.pipeline_mode<synchronous>, transform_indices = @transform_1, window_bounds = array<i64: 2, 512>}, {pipeline_mode = #tpu.pipeline_mode<synchronous>, transform_indices = @transform_2, window_bounds = array<i64: 1, 512>}, {pipeline_mode = #tpu.pipeline_mode<synchronous>, transform_indices = @transform_3, window_bounds = array<i64: 512, 512>}, {pipeline_mode = #tpu.pipeline_mode<synchronous>, transform_indices = @transform_4, window_bounds = array<i64: 1, 512>}, {pipeline_mode = #tpu.pipeline_mode<synchronous>, transform_indices = @transform_5, window_bounds = array<i64: 512, 128>}, {pipeline_mode = #tpu.pipeline_mode<synchronous>, transform_indices = @transform_6, window_bounds = array<i64: 1, 128>}, {transform_indices = @transform_7, window_bounds = array<i64: 8, 128>}]} {
    %c0 = arith.constant 0 : index
    %c0_0 = arith.constant 0 : index
    %0 = vector.load %arg1[%c0, %c0_0] : memref<8x2xf32, #tpu.memory_space<vmem>>, vector<8x2xf32>
    %1 = vector.extract_strided_slice %0 {offsets = [0, 0], sizes = [8, 1], strides = [1, 1]} : vector<8x2xf32> to vector<8x1xf32>
    %c0_1 = arith.constant 0 : index
    %c0_2 = arith.constant 0 : index
    %2 = vector.load %arg2[%c0_1, %c0_2] : memref<2x512xf32, #tpu.memory_space<vmem>>, vector<1x512xf32>
    %3 = vector.broadcast %1 : vector<8x1xf32> to vector<8x512xf32>
    %4 = vector.broadcast %2 : vector<1x512xf32> to vector<8x512xf32>
    %5 = arith.mulf %3, %4 : vector<8x512xf32>
    %6 = vector.extract_strided_slice %0 {offsets = [0, 1], sizes = [8, 1], strides = [1, 1]} : vector<8x2xf32> to vector<8x1xf32>
    %c1 = arith.constant 1 : index
    %c0_3 = arith.constant 0 : index
    %7 = vector.load %arg2[%c1, %c0_3] : memref<2x512xf32, #tpu.memory_space<vmem>>, vector<1x512xf32>
    %8 = vector.broadcast %6 : vector<8x1xf32> to vector<8x512xf32>
    %9 = vector.broadcast %7 : vector<1x512xf32> to vector<8x512xf32>
    %10 = arith.mulf %8, %9 : vector<8x512xf32>
    %11 = arith.addf %5, %10 : vector<8x512xf32>
    %c0_4 = arith.constant 0 : index
    %c0_5 = arith.constant 0 : index
    %12 = vector.load %arg3[%c0_4, %c0_5] : memref<1x512xf32, #tpu.memory_space<vmem>>, vector<1x512xf32>
    %13 = vector.broadcast %12 : vector<1x512xf32> to vector<8x512xf32>
    %14 = arith.addf %11, %13 : vector<8x512xf32>
    %cst = arith.constant 0.000000e+00 : f32
    %15 = vector.broadcast %cst : f32 to vector<8x512xf32>
    %16 = arith.maximumf %14, %15 : vector<8x512xf32>
    %c0_6 = arith.constant 0 : index
    %c0_7 = arith.constant 0 : index
    %17 = vector.load %arg4[%c0_6, %c0_7] : memref<512x512xf32, #tpu.memory_space<vmem>>, vector<512x512xf32>
    %cst_8 = arith.constant dense<0.000000e+00> : vector<8x512xf32>
    %18 = tpu.matmul %16, %17, %cst_8 {dimension_numbers = #tpu.dot_dimension_numbers<[1], [0], [0], [1], [0, 0, 1, 1], [], []>} : vector<8x512xf32>, vector<512x512xf32>, vector<8x512xf32> -> vector<8x512xf32>
    %c0_9 = arith.constant 0 : index
    %c0_10 = arith.constant 0 : index
    %19 = vector.load %arg5[%c0_9, %c0_10] : memref<1x512xf32, #tpu.memory_space<vmem>>, vector<1x512xf32>
    %20 = vector.broadcast %19 : vector<1x512xf32> to vector<8x512xf32>
    %21 = arith.addf %18, %20 : vector<8x512xf32>
    %cst_11 = arith.constant 0.000000e+00 : f32
    %22 = vector.broadcast %cst_11 : f32 to vector<8x512xf32>
    %23 = arith.maximumf %21, %22 : vector<8x512xf32>
    %c0_12 = arith.constant 0 : index
    %c0_13 = arith.constant 0 : index
    %24 = vector.load %arg6[%c0_12, %c0_13] : memref<512x128xf32, #tpu.memory_space<vmem>>, vector<512x128xf32>
    %cst_14 = arith.constant dense<0.000000e+00> : vector<8x128xf32>
    %25 = tpu.matmul %23, %24, %cst_14 {dimension_numbers = #tpu.dot_dimension_numbers<[1], [0], [0], [1], [0, 0, 1, 1], [], []>} : vector<8x512xf32>, vector<512x128xf32>, vector<8x128xf32> -> vector<8x128xf32>
    %c0_15 = arith.constant 0 : index
    %c0_16 = arith.constant 0 : index
    %26 = vector.load %arg7[%c0_15, %c0_16] : memref<1x128xf32, #tpu.memory_space<vmem>>, vector<1x128xf32>
    %27 = vector.broadcast %26 : vector<1x128xf32> to vector<8x128xf32>
    %28 = arith.addf %25, %27 : vector<8x128xf32>
    %c0_17 = arith.constant 0 : index
    %c0_18 = arith.constant 0 : index
    %29 = vector.load %arg8[%c0_17, %c0_18] : memref<8x128xf32, #tpu.memory_space<vmem>>, vector<8x128xf32>
    tpu.vector_store %arg8[%c0_17, %c0_18], %28 {strides = array<i32>} : memref<8x128xf32, #tpu.memory_space<vmem>>, vector<8x128xf32>,
    return
  }
  func.func @transform_0(%arg0: i32) -> (i32, i32) {
    %c0_i32 = arith.constant 0 : i32
    %c0_i32_0 = arith.constant 0 : i32
    return %arg0, %c0_i32 : i32, i32
  }
  func.func @transform_1(%arg0: i32) -> (i32, i32) {
    %c0_i32 = arith.constant 0 : i32
    %c0_i32_0 = arith.constant 0 : i32
    %c0_i32_1 = arith.constant 0 : i32
    return %c0_i32, %c0_i32_0 : i32, i32
  }
  func.func @transform_2(%arg0: i32) -> (i32, i32) {
    %c0_i32 = arith.constant 0 : i32
    %c0_i32_0 = arith.constant 0 : i32
    %c0_i32_1 = arith.constant 0 : i32
    return %c0_i32, %c0_i32_0 : i32, i32
  }
  func.func @transform_3(%arg0: i32) -> (i32, i32) {
    %c0_i32 = arith.constant 0 : i32
    %c0_i32_0 = arith.constant 0 : i32
    %c0_i32_1 = arith.constant 0 : i32
    return %c0_i32, %c0_i32_0 : i32, i32
  }
  func.func @transform_4(%arg0: i32) -> (i32, i32) {
    %c0_i32 = arith.constant 0 : i32
    %c0_i32_0 = arith.constant 0 : i32
    %c0_i32_1 = arith.constant 0 : i32
    return %c0_i32, %c0_i32_0 : i32, i32
  }
  func.func @transform_5(%arg0: i32) -> (i32, i32) {
    %c0_i32 = arith.constant 0 : i32
    %c0_i32_0 = arith.constant 0 : i32
    %c0_i32_1 = arith.constant 0 : i32
    return %c0_i32, %c0_i32_0 : i32, i32
  }
  func.func @transform_6(%arg0: i32) -> (i32, i32) {
    %c0_i32 = arith.constant 0 : i32
    %c0_i32_0 = arith.constant 0 : i32
    %c0_i32_1 = arith.constant 0 : i32
    return %c0_i32, %c0_i32_0 : i32, i32
  }
  func.func @transform_7(%arg0: i32) -> (i32, i32) {
    %c0_i32 = arith.constant 0 : i32
    %c0_i32_0 = arith.constant 0 : i32
    return %arg0, %c0_i32 : i32, i32
  }
}

</mosaic_0001>

<llo_original>
// kernel: tpu_custom_call.1
$region0: #{tpu_custom_call.1}
  #allocation0 [shape = 'u32[]', space=smem, size = 0x4, offset = 0x4, fixed_abs, tag = 'smem constant byte address 0x4 - core index']
  #allocation1 [shape = 'u32[144,128]{1,0:T(1,128)}', space=vmem, size = 0x12000, scoped, tag = 'internal scratch']
  %s0 = inlined_call_operand.vmem [shape: f32[8,2], index: 0, kind: input, shape index: {}]
  %s1 = inlined_call_operand.vmem [shape: f32[2,512], index: 1, kind: input, shape index: {}]
  %s2 = inlined_call_operand.vmem [shape: f32[1,512], index: 2, kind: input, shape index: {}]
  %s3 = inlined_call_operand.hbm [shape: f32[512,512], index: 3, kind: input, shape index: {}]
  %s4 = inlined_call_operand.vmem [shape: f32[1,512], index: 4, kind: input, shape index: {}]
  %s5 = inlined_call_operand.hbm [shape: f32[512,128], index: 5, kind: input, shape index: {}]
  %s6 = inlined_call_operand.vmem [shape: f32[1,128], index: 6, kind: input, shape index: {}]
  %s7 = inlined_call_operand.hbm [shape: f32[8,128], index: 7, kind: output, shape index: {}]
  %s8 = sld [smem:[#allocation0]]
  $region46: #{tpu_custom_call.1} parent=0
    _
  %s10 = ssub.s32 1, %s8
  %s11 = scalar_select 0, %s10, %s8
  $region1: #{tpu_custom_call.1} parent=0
    #allocation2 [shape = 'u8[1048576]{0}', space=vmem, size = 0x100000, scoped, tag = 'input window, operand 3, single buffered']
    #allocation3 [shape = 's32[1]{0}', space=sflag, size = 0x4, scoped, tag = 'scoped memory for tpu_custom_call.1']
    #allocation4 [shape = 's32[1]{0}', space=sflag, size = 0x4, scoped, tag = 'scoped memory for tpu_custom_call.1']
    #allocation5 [shape = 'u8[262144]{0}', space=vmem, size = 0x40000, scoped, tag = 'input window, operand 5, single buffered']
    #allocation6 [shape = 's32[1]{0}', space=sflag, size = 0x4, scoped, tag = 'scoped memory for tpu_custom_call.1']
    #allocation7 [shape = 'u8[4096]{0}', space=vmem, size = 0x1000, scoped, tag = 'output window, operand 0, single buffered']
    %12 = vsyncpa [#allocation3], 0
    %13 = vsyncpa [#allocation6], 0
    %14 = vsyncpa [#allocation4], 0
    // Predicated region
    $region2: #{tpu_custom_call.1} parent=1 // pred_check
      _
    $region3: #{tpu_custom_call.1} parent=1 // pred_check_branch
      %16 = sbr.rel (0) target = $region5
    $region4: #{tpu_custom_call.1} parent=1 // pred_region
      _
    $region5: #{tpu_custom_call.1} parent=1 // pred_fallthru
      _
    // Predicated region
    $region6: #{tpu_custom_call.1} parent=1 // pred_check
      _
    $region7: #{tpu_custom_call.1} parent=1 // pred_check_branch
      %18 = sbr.rel (0) target = $region9
    $region8: #{tpu_custom_call.1} parent=1 // pred_region
      _
    $region9: #{tpu_custom_call.1} parent=1 // pred_fallthru
      _
    // Predicated region
    $region10: #{tpu_custom_call.1} parent=1 // pred_check
      _
    $region11: #{tpu_custom_call.1} parent=1 // pred_check_branch
      %20 = sbr.rel (0) target = $region13
    $region12: #{tpu_custom_call.1} parent=1 // pred_region
      _
    $region13: #{tpu_custom_call.1} parent=1 // pred_fallthru
      _
    // Predicated region
    $region14: #{tpu_custom_call.1} parent=1 // pred_check
      _
    $region15: #{tpu_custom_call.1} parent=1 // pred_check_branch
      %22 = sbr.rel (0) target = $region17
    $region16: #{tpu_custom_call.1} parent=1 // pred_region
      %s24 = ssub.s32 32768, 32768
      %25 = vsyncadd [#allocation3], %s24
      %s26 = sshll.u32 [#allocation2], 4
      %s27 = int_to_ptr.vmem [resolvable:$true] %s26
      %32 = dma.hbm_to_vmem [thread:$0]  %s3, 32768, %s27, [#allocation3], 512, 512, 32
    $region17: #{tpu_custom_call.1} parent=1 // pred_fallthru
      _
    // Predicated region
    $region18: #{tpu_custom_call.1} parent=1 // pred_check
      _
    $region19: #{tpu_custom_call.1} parent=1 // pred_check_branch
      %34 = sbr.rel (0) target = $region21
    $region20: #{tpu_custom_call.1} parent=1 // pred_region
      _
    $region21: #{tpu_custom_call.1} parent=1 // pred_fallthru
      _
    // Predicated region
    $region22: #{tpu_custom_call.1} parent=1 // pred_check
      _
    $region23: #{tpu_custom_call.1} parent=1 // pred_check_branch
      %36 = sbr.rel (0) target = $region25
    $region24: #{tpu_custom_call.1} parent=1 // pred_region
      %s38 = ssub.s32 8192, 8192
      %39 = vsyncadd [#allocation6], %s38
      %s40 = sshll.u32 [#allocation5], 4
      %s41 = int_to_ptr.vmem [resolvable:$true] %s40
      %46 = dma.hbm_to_vmem [thread:$0]  %s5, 8192, %s41, [#allocation6], 128, 128, 8
    $region25: #{tpu_custom_call.1} parent=1 // pred_fallthru
      _
    // Predicated region
    $region26: #{tpu_custom_call.1} parent=1 // pred_check
      _
    $region27: #{tpu_custom_call.1} parent=1 // pred_check_branch
      %48 = sbr.rel (0) target = $region29
    $region28: #{tpu_custom_call.1} parent=1 // pred_region
      _
    $region29: #{tpu_custom_call.1} parent=1 // pred_fallthru
      _
    // Predicated region
    $region30: #{tpu_custom_call.1} parent=1 // pred_check
      _
    $region31: #{tpu_custom_call.1} parent=1 // pred_check_branch
      %50 = sbr.rel (0) target = $region33
    $region32: #{tpu_custom_call.1} parent=1 // pred_region
      %51 = dma.done [#allocation3], 32768
    $region33: #{tpu_custom_call.1} parent=1 // pred_fallthru
      _
    // Predicated region
    $region34: #{tpu_custom_call.1} parent=1 // pred_check
      _
    $region35: #{tpu_custom_call.1} parent=1 // pred_check_branch
      %53 = sbr.rel (0) target = $region37
    $region36: #{tpu_custom_call.1} parent=1 // pred_region
      %54 = dma.done [#allocation6], 8192
    $region37: #{tpu_custom_call.1} parent=1 // pred_fallthru
      _
    %v55 = vld [vmem:[%s0] sm:$0xff]
    %v56 = vld [vmem:[%s1] ss:$2 sm:$0xf]
    %58 = vset.pattern.permute.xlu0 0
    %59 = vperm.xlu0 %58, %v55
    %v60 = vpop.permute.xlu0 %59
    %v63 = vlaneseq
    %v64 = vshrl.u32 %v63, 7
    %v65 = vsub.s32 0, %v64
    %v66 = vrot.slane %v56, %v65
    %v67 = vlaneseq
    %v68 = vshrl.u32 %v67, 7
    %v69 = vsub.s32 1, %v68
    %v70 = vrot.slane %v56, %v69
    %v71 = vlaneseq
    %v72 = vshrl.u32 %v71, 7
    %v73 = vsub.s32 2, %v72
    %v74 = vrot.slane %v56, %v73
    %v75 = vlaneseq
    %v76 = vshrl.u32 %v75, 7
    %v77 = vsub.s32 3, %v76
    %v78 = vrot.slane %v56, %v77
    %v83 = vmul.f32 %v60, %v66
    %v84 = vmul.f32 %v60, %v70
    %v85 = vmul.f32 %v60, %v74
    %v86 = vmul.f32 %v60, %v78
    %s87 = scalar_lea.vmem %s1, 1
    %v88 = vld [vmem:[%s87] ss:$2 sm:$0xf]
    %89 = vset.pattern.permute.xlu0 1
    %90 = vperm.xlu0 %89, %v55
    %v91 = vpop.permute.xlu0 %90
    %v94 = vlaneseq
    %v95 = vshrl.u32 %v94, 7
    %v96 = vsub.s32 0, %v95
    %v97 = vrot.slane %v88, %v96
    %v98 = vlaneseq
    %v99 = vshrl.u32 %v98, 7
    %v100 = vsub.s32 1, %v99
    %v101 = vrot.slane %v88, %v100
    %v102 = vlaneseq
    %v103 = vshrl.u32 %v102, 7
    %v104 = vsub.s32 2, %v103
    %v105 = vrot.slane %v88, %v104
    %v106 = vlaneseq
    %v107 = vshrl.u32 %v106, 7
    %v108 = vsub.s32 3, %v107
    %v109 = vrot.slane %v88, %v108
    %v114 = vmul.f32 %v91, %v97
    %v115 = vmul.f32 %v91, %v101
    %v116 = vmul.f32 %v91, %v105
    %v117 = vmul.f32 %v91, %v109
    %v118 = vadd.f32 %v83, %v114
    %v119 = vadd.f32 %v84, %v115
    %v120 = vadd.f32 %v85, %v116
    %v121 = vadd.f32 %v86, %v117
    %v122 = vld [vmem:[%s2] sm:$0xf]
    %v124 = vlaneseq
    %v125 = vshrl.u32 %v124, 7
    %v126 = vsub.s32 0, %v125
    %v127 = vrot.slane %v122, %v126
    %v128 = vlaneseq
    %v129 = vshrl.u32 %v128, 7
    %v130 = vsub.s32 1, %v129
    %v131 = vrot.slane %v122, %v130
    %v132 = vlaneseq
    %v133 = vshrl.u32 %v132, 7
    %v134 = vsub.s32 2, %v133
    %v135 = vrot.slane %v122, %v134
    %v136 = vlaneseq
    %v137 = vshrl.u32 %v136, 7
    %v138 = vsub.s32 3, %v137
    %v139 = vrot.slane %v122, %v138
    %v144 = vadd.f32 %v118, %v127
    %v145 = vadd.f32 %v119, %v131
    %v146 = vadd.f32 %v120, %v135
    %v147 = vadd.f32 %v121, %v139
    %v148 = vmax.f32 %v144, 0.0
    %v149 = vmax.f32 %v145, 0.0
    %v150 = vmax.f32 %v146, 0.0
    %v151 = vmax.f32 %v147, 0.0
    %v152 = vld [vmem:[#allocation2] sm:$0xff]
    %v153 = vld [vmem:[#allocation2 + $0x8] sm:$0xff]
    %v154 = vld [vmem:[#allocation2 + $0x10] sm:$0xff]
    %v155 = vld [vmem:[#allocation2 + $0x18] sm:$0xff]
    %v156 = vld [vmem:[#allocation2 + $0x20] sm:$0xff]
    %v157 = vld [vmem:[#allocation2 + $0x28] sm:$0xff]
    %v158 = vld [vmem:[#allocation2 + $0x30] sm:$0xff]
    %v159 = vld [vmem:[#allocation2 + $0x38] sm:$0xff]
    %v160 = vld [vmem:[#allocation2 + $0x40] sm:$0xff]
    %v161 = vld [vmem:[#allocation2 + $0x48] sm:$0xff]
    %v162 = vld [vmem:[#allocation2 + $0x50] sm:$0xff]
    %v163 = vld [vmem:[#allocation2 + $0x58] sm:$0xff]
    %v164 = vld [vmem:[#allocation2 + $0x60] sm:$0xff]
    %v165 = vld [vmem:[#allocation2 + $0x68] sm:$0xff]
    %v166 = vld [vmem:[#allocation2 + $0x70] sm:$0xff]
    %v167 = vld [vmem:[#allocation2 + $0x78] sm:$0xff]
    %v168 = vld [vmem:[#allocation2 + $0x80] sm:$0xff]
    %v169 = vld [vmem:[#allocation2 + $0x88] sm:$0xff]
    %v170 = vld [vmem:[#allocation2 + $0x90] sm:$0xff]
    %v171 = vld [vmem:[#allocation2 + $0x98] sm:$0xff]
    %v172 = vld [vmem:[#allocation2 + $0xa0] sm:$0xff]
    %v173 = vld [vmem:[#allocation2 + $0xa8] sm:$0xff]
    %v174 = vld [vmem:[#allocation2 + $0xb0] sm:$0xff]
    %v175 = vld [vmem:[#allocation2 + $0xb8] sm:$0xff]
    %v176 = vld [vmem:[#allocation2 + $0xc0] sm:$0xff]
    %v177 = vld [vmem:[#allocation2 + $0xc8] sm:$0xff]
    %v178 = vld [vmem:[#allocation2 + $0xd0] sm:$0xff]
    %v179 = vld [vmem:[#allocation2 + $0xd8] sm:$0xff]
    %v180 = vld [vmem:[#allocation2 + $0xe0] sm:$0xff]
    %v181 = vld [vmem:[#allocation2 + $0xe8] sm:$0xff]
    %v182 = vld [vmem:[#allocation2 + $0xf0] sm:$0xff]
    %v183 = vld [vmem:[#allocation2 + $0xf8] sm:$0xff]
    %v184 = vld [vmem:[#allocation2 + $0x100] sm:$0xff]
    %v185 = vld [vmem:[#allocation2 + $0x108] sm:$0xff]
    %v186 = vld [vmem:[#allocation2 + $0x110] sm:$0xff]
    %v187 = vld [vmem:[#allocation2 + $0x118] sm:$0xff]
    %v188 = vld [vmem:[#allocation2 + $0x120] sm:$0xff]
    %v189 = vld [vmem:[#allocation2 + $0x128] sm:$0xff]
    %v190 = vld [vmem:[#allocation2 + $0x130] sm:$0xff]
    %v191 = vld [vmem:[#allocation2 + $0x138] sm:$0xff]
    %v192 = vld [vmem:[#allocation2 + $0x140] sm:$0xff]
    %v193 = vld [vmem:[#allocation2 + $0x148] sm:$0xff]
    %v194 = vld [vmem:[#allocation2 + $0x150] sm:$0xff]
    %v195 = vld [vmem:[#allocation2 + $0x158] sm:$0xff]
    %v196 = vld [vmem:[#allocation2 + $0x160] sm:$0xff]
    %v197 = vld [vmem:[#allocation2 + $0x168] sm:$0xff]
    %v198 = vld [vmem:[#allocation2 + $0x170] sm:$0xff]
    %v199 = vld [vmem:[#allocation2 + $0x178] sm:$0xff]
    %v200 = vld [vmem:[#allocation2 + $0x180] sm:$0xff]
    %v201 = vld [vmem:[#allocation2 + $0x188] sm:$0xff]
    %v202 = vld [vmem:[#allocation2 + $0x190] sm:$0xff]
    %v203 = vld [vmem:[#allocation2 + $0x198] sm:$0xff]
    %v204 = vld [vmem:[#allocation2 + $0x1a0] sm:$0xff]
    %v205 = vld [vmem:[#allocation2 + $0x1a8] sm:$0xff]
    %v206 = vld [vmem:[#allocation2 + $0x1b0] sm:$0xff]
    %v207 = vld [vmem:[#allocation2 + $0x1b8] sm:$0xff]
    %v208 = vld [vmem:[#allocation2 + $0x1c0] sm:$0xff]
    %v209 = vld [vmem:[#allocation2 + $0x1c8] sm:$0xff]
    %v210 = vld [vmem:[#allocation2 + $0x1d0] sm:$0xff]
    %v211 = vld [vmem:[#allocation2 + $0x1d8] sm:$0xff]
    %v212 = vld [vmem:[#allocation2 + $0x1e0] sm:$0xff]
    %v213 = vld [vmem:[#allocation2 + $0x1e8] sm:$0xff]
    %v214 = vld [vmem:[#allocation2 + $0x1f0] sm:$0xff]
    %v215 = vld [vmem:[#allocation2 + $0x1f8] sm:$0xff]
    %v216 = vld [vmem:[#allocation2 + $0x200] sm:$0xff]
    %v217 = vld [vmem:[#allocation2 + $0x208] sm:$0xff]
    %v218 = vld [vmem:[#allocation2 + $0x210] sm:$0xff]
    %v219 = vld [vmem:[#allocation2 + $0x218] sm:$0xff]
    %v220 = vld [vmem:[#allocation2 + $0x220] sm:$0xff]
    %v221 = vld [vmem:[#allocation2 + $0x228] sm:$0xff]
    %v222 = vld [vmem:[#allocation2 + $0x230] sm:$0xff]
    %v223 = vld [vmem:[#allocation2 + $0x238] sm:$0xff]
    %v224 = vld [vmem:[#allocation2 + $0x240] sm:$0xff]
    %v225 = vld [vmem:[#allocation2 + $0x248] sm:$0xff]
    %v226 = vld [vmem:[#allocation2 + $0x250] sm:$0xff]
    %v227 = vld [vmem:[#allocation2 + $0x258] sm:$0xff]
    %v228 = vld [vmem:[#allocation2 + $0x260] sm:$0xff]
    %v229 = vld [vmem:[#allocation2 + $0x268] sm:$0xff]
    %v230 = vld [vmem:[#allocation2 + $0x270] sm:$0xff]
    %v231 = vld [vmem:[#allocation2 + $0x278] sm:$0xff]
    %v232 = vld [vmem:[#allocation2 + $0x280] sm:$0xff]
    %v233 = vld [vmem:[#allocation2 + $0x288] sm:$0xff]
    %v234 = vld [vmem:[#allocation2 + $0x290] sm:$0xff]
    %v235 = vld [vmem:[#allocation2 + $0x298] sm:$0xff]
    %v236 = vld [vmem:[#allocation2 + $0x2a0] sm:$0xff]
    %v237 = vld [vmem:[#allocation2 + $0x2a8] sm:$0xff]
    %v238 = vld [vmem:[#allocation2 + $0x2b0] sm:$0xff]
    %v239 = vld [vmem:[#allocation2 + $0x2b8] sm:$0xff]
    %v240 = vld [vmem:[#allocation2 + $0x2c0] sm:$0xff]
    %v241 = vld [vmem:[#allocation2 + $0x2c8] sm:$0xff]
    %v242 = vld [vmem:[#allocation2 + $0x2d0] sm:$0xff]
    %v243 = vld [vmem:[#allocation2 + $0x2d8] sm:$0xff]
    %v244 = vld [vmem:[#allocation2 + $0x2e0] sm:$0xff]
    %v245 = vld [vmem:[#allocation2 + $0x2e8] sm:$0xff]
    %v246 = vld [vmem:[#allocation2 + $0x2f0] sm:$0xff]
    %v247 = vld [vmem:[#allocation2 + $0x2f8] sm:$0xff]
    %v248 = vld [vmem:[#allocation2 + $0x300] sm:$0xff]
    %v249 = vld [vmem:[#allocation2 + $0x308] sm:$0xff]
    %v250 = vld [vmem:[#allocation2 + $0x310] sm:$0xff]
    %v251 = vld [vmem:[#allocation2 + $0x318] sm:$0xff]
    %v252 = vld [vmem:[#allocation2 + $0x320] sm:$0xff]
    %v253 = vld [vmem:[#allocation2 + $0x328] sm:$0xff]
    %v254 = vld [vmem:[#allocation2 + $0x330] sm:$0xff]
    %v255 = vld [vmem:[#allocation2 + $0x338] sm:$0xff]
    %v256 = vld [vmem:[#allocation2 + $0x340] sm:$0xff]
    %v257 = vld [vmem:[#allocation2 + $0x348] sm:$0xff]
    %v258 = vld [vmem:[#allocation2 + $0x350] sm:$0xff]
    %v259 = vld [vmem:[#allocation2 + $0x358] sm:$0xff]
    %v260 = vld [vmem:[#allocation2 + $0x360] sm:$0xff]
    %v261 = vld [vmem:[#allocation2 + $0x368] sm:$0xff]
    %v262 = vld [vmem:[#allocation2 + $0x370] sm:$0xff]
    %v263 = vld [vmem:[#allocation2 + $0x378] sm:$0xff]
    %v264 = vld [vmem:[#allocation2 + $0x380] sm:$0xff]
    %v265 = vld [vmem:[#allocation2 + $0x388] sm:$0xff]
    %v266 = vld [vmem:[#allocation2 + $0x390] sm:$0xff]
    %v267 = vld [vmem:[#allocation2 + $0x398] sm:$0xff]
    %v268 = vld [vmem:[#allocation2 + $0x3a0] sm:$0xff]
    %v269 = vld [vmem:[#allocation2 + $0x3a8] sm:$0xff]
    %v270 = vld [vmem:[#allocation2 + $0x3b0] sm:$0xff]
    %v271 = vld [vmem:[#allocation2 + $0x3b8] sm:$0xff]
    %v272 = vld [vmem:[#allocation2 + $0x3c0] sm:$0xff]
    %v273 = vld [vmem:[#allocation2 + $0x3c8] sm:$0xff]
    %v274 = vld [vmem:[#allocation2 + $0x3d0] sm:$0xff]
    %v275 = vld [vmem:[#allocation2 + $0x3d8] sm:$0xff]
    %v276 = vld [vmem:[#allocation2 + $0x3e0] sm:$0xff]
    %v277 = vld [vmem:[#allocation2 + $0x3e8] sm:$0xff]
    %v278 = vld [vmem:[#allocation2 + $0x3f0] sm:$0xff]
    %v279 = vld [vmem:[#allocation2 + $0x3f8] sm:$0xff]
    %v280 = vld [vmem:[#allocation2 + $0x400] sm:$0xff]
    %v281 = vld [vmem:[#allocation2 + $0x408] sm:$0xff]
    %v282 = vld [vmem:[#allocation2 + $0x410] sm:$0xff]
    %v283 = vld [vmem:[#allocation2 + $0x418] sm:$0xff]
    %v284 = vld [vmem:[#allocation2 + $0x420] sm:$0xff]
    %v285 = vld [vmem:[#allocation2 + $0x428] sm:$0xff]
    %v286 = vld [vmem:[#allocation2 + $0x430] sm:$0xff]
    %v287 = vld [vmem:[#allocation2 + $0x438] sm:$0xff]
    %v288 = vld [vmem:[#allocation2 + $0x440] sm:$0xff]
    %v289 = vld [vmem:[#allocation2 + $0x448] sm:$0xff]
    %v290 = vld [vmem:[#allocation2 + $0x450] sm:$0xff]
    %v291 = vld [vmem:[#allocation2 + $0x458] sm:$0xff]
    %v292 = vld [vmem:[#allocation2 + $0x460] sm:$0xff]
    %v293 = vld [vmem:[#allocation2 + $0x468] sm:$0xff]
    %v294 = vld [vmem:[#allocation2 + $0x470] sm:$0xff]
    %v295 = vld [vmem:[#allocation2 + $0x478] sm:$0xff]
    %v296 = vld [vmem:[#allocation2 + $0x480] sm:$0xff]
    %v297 = vld [vmem:[#allocation2 + $0x488] sm:$0xff]
    %v298 = vld [vmem:[#allocation2 + $0x490] sm:$0xff]
    %v299 = vld [vmem:[#allocation2 + $0x498] sm:$0xff]
    %v300 = vld [vmem:[#allocation2 + $0x4a0] sm:$0xff]
    %v301 = vld [vmem:[#allocation2 + $0x4a8] sm:$0xff]
    %v302 = vld [vmem:[#allocation2 + $0x4b0] sm:$0xff]
    %v303 = vld [vmem:[#allocation2 + $0x4b8] sm:$0xff]
    %v304 = vld [vmem:[#allocation2 + $0x4c0] sm:$0xff]
    %v305 = vld [vmem:[#allocation2 + $0x4c8] sm:$0xff]
    %v306 = vld [vmem:[#allocation2 + $0x4d0] sm:$0xff]
    %v307 = vld [vmem:[#allocation2 + $0x4d8] sm:$0xff]
    %v308 = vld [vmem:[#allocation2 + $0x4e0] sm:$0xff]
    %v309 = vld [vmem:[#allocation2 + $0x4e8] sm:$0xff]
    %v310 = vld [vmem:[#allocation2 + $0x4f0] sm:$0xff]
    %v311 = vld [vmem:[#allocation2 + $0x4f8] sm:$0xff]
    %v312 = vld [vmem:[#allocation2 + $0x500] sm:$0xff]
    %v313 = vld [vmem:[#allocation2 + $0x508] sm:$0xff]
    %v314 = vld [vmem:[#allocation2 + $0x510] sm:$0xff]
    %v315 = vld [vmem:[#allocation2 + $0x518] sm:$0xff]
    %v316 = vld [vmem:[#allocation2 + $0x520] sm:$0xff]
    %v317 = vld [vmem:[#allocation2 + $0x528] sm:$0xff]
    %v318 = vld [vmem:[#allocation2 + $0x530] sm:$0xff]
    %v319 = vld [vmem:[#allocation2 + $0x538] sm:$0xff]
    %v320 = vld [vmem:[#allocation2 + $0x540] sm:$0xff]
    %v321 = vld [vmem:[#allocation2 + $0x548] sm:$0xff]
    %v322 = vld [vmem:[#allocation2 + $0x550] sm:$0xff]
    %v323 = vld [vmem:[#allocation2 + $0x558] sm:$0xff]
    %v324 = vld [vmem:[#allocation2 + $0x560] sm:$0xff]
    %v325 = vld [vmem:[#allocation2 + $0x568] sm:$0xff]
    %v326 = vld [vmem:[#allocation2 + $0x570] sm:$0xff]
    %v327 = vld [vmem:[#allocation2 + $0x578] sm:$0xff]
    %v328 = vld [vmem:[#allocation2 + $0x580] sm:$0xff]
    %v329 = vld [vmem:[#allocation2 + $0x588] sm:$0xff]
    %v330 = vld [vmem:[#allocation2 + $0x590] sm:$0xff]
    %v331 = vld [vmem:[#allocation2 + $0x598] sm:$0xff]
    %v332 = vld [vmem:[#allocation2 + $0x5a0] sm:$0xff]
    %v333 = vld [vmem:[#allocation2 + $0x5a8] sm:$0xff]
    %v334 = vld [vmem:[#allocation2 + $0x5b0] sm:$0xff]
    %v335 = vld [vmem:[#allocation2 + $0x5b8] sm:$0xff]
    %v336 = vld [vmem:[#allocation2 + $0x5c0] sm:$0xff]
    %v337 = vld [vmem:[#allocation2 + $0x5c8] sm:$0xff]
    %v338 = vld [vmem:[#allocation2 + $0x5d0] sm:$0xff]
    %v339 = vld [vmem:[#allocation2 + $0x5d8] sm:$0xff]
    %v340 = vld [vmem:[#allocation2 + $0x5e0] sm:$0xff]
    %v341 = vld [vmem:[#allocation2 + $0x5e8] sm:$0xff]
    %v342 = vld [vmem:[#allocation2 + $0x5f0] sm:$0xff]
    %v343 = vld [vmem:[#allocation2 + $0x5f8] sm:$0xff]
    %v344 = vld [vmem:[#allocation2 + $0x600] sm:$0xff]
    %v345 = vld [vmem:[#allocation2 + $0x608] sm:$0xff]
    %v346 = vld [vmem:[#allocation2 + $0x610] sm:$0xff]
    %v347 = vld [vmem:[#allocation2 + $0x618] sm:$0xff]
    %v348 = vld [vmem:[#allocation2 + $0x620] sm:$0xff]
    %v349 = vld [vmem:[#allocation2 + $0x628] sm:$0xff]
    %v350 = vld [vmem:[#allocation2 + $0x630] sm:$0xff]
    %v351 = vld [vmem:[#allocation2 + $0x638] sm:$0xff]
    %v352 = vld [vmem:[#allocation2 + $0x640] sm:$0xff]
    %v353 = vld [vmem:[#allocation2 + $0x648] sm:$0xff]
    %v354 = vld [vmem:[#allocation2 + $0x650] sm:$0xff]
    %v355 = vld [vmem:[#allocation2 + $0x658] sm:$0xff]
    %v356 = vld [vmem:[#allocation2 + $0x660] sm:$0xff]
    %v357 = vld [vmem:[#allocation2 + $0x668] sm:$0xff]
    %v358 = vld [vmem:[#allocation2 + $0x670] sm:$0xff]
    %v359 = vld [vmem:[#allocation2 + $0x678] sm:$0xff]
    %v360 = vld [vmem:[#allocation2 + $0x680] sm:$0xff]
    %v361 = vld [vmem:[#allocation2 + $0x688] sm:$0xff]
    %v362 = vld [vmem:[#allocation2 + $0x690] sm:$0xff]
    %v363 = vld [vmem:[#allocation2 + $0x698] sm:$0xff]
    %v364 = vld [vmem:[#allocation2 + $0x6a0] sm:$0xff]
    %v365 = vld [vmem:[#allocation2 + $0x6a8] sm:$0xff]
    %v366 = vld [vmem:[#allocation2 + $0x6b0] sm:$0xff]
    %v367 = vld [vmem:[#allocation2 + $0x6b8] sm:$0xff]
    %v368 = vld [vmem:[#allocation2 + $0x6c0] sm:$0xff]
    %v369 = vld [vmem:[#allocation2 + $0x6c8] sm:$0xff]
    %v370 = vld [vmem:[#allocation2 + $0x6d0] sm:$0xff]
    %v371 = vld [vmem:[#allocation2 + $0x6d8] sm:$0xff]
    %v372 = vld [vmem:[#allocation2 + $0x6e0] sm:$0xff]
    %v373 = vld [vmem:[#allocation2 + $0x6e8] sm:$0xff]
    %v374 = vld [vmem:[#allocation2 + $0x6f0] sm:$0xff]
    %v375 = vld [vmem:[#allocation2 + $0x6f8] sm:$0xff]
    %v376 = vld [vmem:[#allocation2 + $0x700] sm:$0xff]
    %v377 = vld [vmem:[#allocation2 + $0x708] sm:$0xff]
    %v378 = vld [vmem:[#allocation2 + $0x710] sm:$0xff]
    %v379 = vld [vmem:[#allocation2 + $0x718] sm:$0xff]
    %v380 = vld [vmem:[#allocation2 + $0x720] sm:$0xff]
    %v381 = vld [vmem:[#allocation2 + $0x728] sm:$0xff]
    %v382 = vld [vmem:[#allocation2 + $0x730] sm:$0xff]
    %v383 = vld [vmem:[#allocation2 + $0x738] sm:$0xff]
    %v384 = vld [vmem:[#allocation2 + $0x740] sm:$0xff]
    %v385 = vld [vmem:[#allocation2 + $0x748] sm:$0xff]
    %v386 = vld [vmem:[#allocation2 + $0x750] sm:$0xff]
    %v387 = vld [vmem:[#allocation2 + $0x758] sm:$0xff]
    %v388 = vld [vmem:[#allocation2 + $0x760] sm:$0xff]
    %v389 = vld [vmem:[#allocation2 + $0x768] sm:$0xff]
    %v390 = vld [vmem:[#allocation2 + $0x770] sm:$0xff]
    %v391 = vld [vmem:[#allocation2 + $0x778] sm:$0xff]
    %v392 = vld [vmem:[#allocation2 + $0x780] sm:$0xff]
    %v393 = vld [vmem:[#allocation2 + $0x788] sm:$0xff]
    %v394 = vld [vmem:[#allocation2 + $0x790] sm:$0xff]
    %v395 = vld [vmem:[#allocation2 + $0x798] sm:$0xff]
    %v396 = vld [vmem:[#allocation2 + $0x7a0] sm:$0xff]
    %v397 = vld [vmem:[#allocation2 + $0x7a8] sm:$0xff]
    %v398 = vld [vmem:[#allocation2 + $0x7b0] sm:$0xff]
    %v399 = vld [vmem:[#allocation2 + $0x7b8] sm:$0xff]
    %v400 = vld [vmem:[#allocation2 + $0x7c0] sm:$0xff]
    %v401 = vld [vmem:[#allocation2 + $0x7c8] sm:$0xff]
    %v402 = vld [vmem:[#allocation2 + $0x7d0] sm:$0xff]
    %v403 = vld [vmem:[#allocation2 + $0x7d8] sm:$0xff]
    %v404 = vld [vmem:[#allocation2 + $0x7e0] sm:$0xff]
    %v405 = vld [vmem:[#allocation2 + $0x7e8] sm:$0xff]
    %v406 = vld [vmem:[#allocation2 + $0x7f0] sm:$0xff]
    %v407 = vld [vmem:[#allocation2 + $0x7f8] sm:$0xff]
    %v408 = vld [vmem:[%s4] sm:$0xf]
    %v410 = vlaneseq
    %v411 = vshrl.u32 %v410, 7
    %v412 = vsub.s32 0, %v411
    %v413 = vrot.slane %v408, %v412
    %v414 = vlaneseq
    %v415 = vshrl.u32 %v414, 7
    %v416 = vsub.s32 1, %v415
    %v417 = vrot.slane %v408, %v416
    %v418 = vlaneseq
    %v419 = vshrl.u32 %v418, 7
    %v420 = vsub.s32 2, %v419
    %v421 = vrot.slane %v408, %v420
    %v422 = vlaneseq
    %v423 = vshrl.u32 %v422, 7
    %v424 = vsub.s32 3, %v423
    %v425 = vrot.slane %v408, %v424
    %430 = vmatprep.subr.mxu0 %v153
    %431 = vmatpush1.msra.mxu0 %v152
    %432 = vmatprep.subr.mxu0 %v157
    %433 = vmatpush1.msra.mxu0 %v156
    %434 = vmatprep.subr.mxu0 %v161
    %435 = vmatpush1.msra.mxu0 %v160
    %436 = vmatprep.subr.mxu0 %v165
    %437 = vmatpush1.msra.mxu0 %v164
    %438 = vmatprep.subr.mxu0 %v169
    %439 = vmatpush1.msra.mxu0 %v168
    %440 = vmatprep.subr.mxu0 %v173
    %441 = vmatpush1.msra.mxu0 %v172
    %442 = vmatprep.subr.mxu0 %v177
    %443 = vmatpush1.msra.mxu0 %v176
    %444 = vmatprep.subr.mxu0 %v181
    %445 = vmatpush1.msra.mxu0 %v180
    %446 = vmatprep.subr.mxu0 %v185
    %447 = vmatpush1.msra.mxu0 %v184
    %448 = vmatprep.subr.mxu0 %v189
    %449 = vmatpush1.msra.mxu0 %v188
    %450 = vmatprep.subr.mxu0 %v193
    %451 = vmatpush1.msra.mxu0 %v192
    %452 = vmatprep.subr.mxu0 %v197
    %453 = vmatpush1.msra.mxu0 %v196
    %454 = vmatprep.subr.mxu0 %v201
    %455 = vmatpush1.msra.mxu0 %v200
    %456 = vmatprep.subr.mxu0 %v205
    %457 = vmatpush1.msra.mxu0 %v204
    %458 = vmatprep.subr.mxu0 %v209
    %459 = vmatpush1.msra.mxu0 %v208
    %460 = vmatprep.subr.mxu0 %v213
    %461 = vmatpush1.msra.mxu0 %v212
    %462 = vmatprep.subr.mxu0 %v217
    %463 = vmatpush1.msra.mxu0 %v216
    %464 = vmatprep.subr.mxu0 %v221
    %465 = vmatpush1.msra.mxu0 %v220
    %466 = vmatprep.subr.mxu0 %v225
    %467 = vmatpush1.msra.mxu0 %v224
    %468 = vmatprep.subr.mxu0 %v229
    %469 = vmatpush1.msra.mxu0 %v228
    %470 = vmatprep.subr.mxu0 %v233
    %471 = vmatpush1.msra.mxu0 %v232
    %472 = vmatprep.subr.mxu0 %v237
    %473 = vmatpush1.msra.mxu0 %v236
    %474 = vmatprep.subr.mxu0 %v241
    %475 = vmatpush1.msra.mxu0 %v240
    %476 = vmatprep.subr.mxu0 %v245
    %477 = vmatpush1.msra.mxu0 %v244
    %478 = vmatprep.subr.mxu0 %v249
    %479 = vmatpush1.msra.mxu0 %v248
    %480 = vmatprep.subr.mxu0 %v253
    %481 = vmatpush1.msra.mxu0 %v252
    %482 = vmatprep.subr.mxu0 %v257
    %483 = vmatpush1.msra.mxu0 %v256
    %484 = vmatprep.subr.mxu0 %v261
    %485 = vmatpush1.msra.mxu0 %v260
    %486 = vmatprep.subr.mxu0 %v265
    %487 = vmatpush1.msra.mxu0 %v264
    %488 = vmatprep.subr.mxu0 %v269
    %489 = vmatpush1.msra.mxu0 %v268
    %490 = vmatprep.subr.mxu0 %v273
    %491 = vmatpush1.msra.mxu0 %v272
    %492 = vmatprep.subr.mxu0 %v277
    %493 = vmatpush1.msra.mxu0 %v276
    %494 = vmatprep.mubr.f32.mxu0 %v149
    %495 = vmatmul.mubr.f32.gmra.mrb[0].mxu0 %v148
    %v496 = vpop.f32.mrb[0].mxu0
    %v497 = vadd.f32 %v413, %v496
    %v498 = vpop.f32.mrb[0].mxu0
    %v499 = vadd.f32 %v417, %v498
    %500 = vdwg.mxu0
    %501 = vmatprep.subr.mxu0 %v281
    %502 = vmatpush1.msra.mxu0 %v280
    %503 = vmatprep.subr.mxu0 %v285
    %504 = vmatpush1.msra.mxu0 %v284
    %505 = vmatprep.subr.mxu0 %v289
    %506 = vmatpush1.msra.mxu0 %v288
    %507 = vmatprep.subr.mxu0 %v293
    %508 = vmatpush1.msra.mxu0 %v292
    %509 = vmatprep.subr.mxu0 %v297
    %510 = vmatpush1.msra.mxu0 %v296
    %511 = vmatprep.subr.mxu0 %v301
    %512 = vmatpush1.msra.mxu0 %v300
    %513 = vmatprep.subr.mxu0 %v305
    %514 = vmatpush1.msra.mxu0 %v304
    %515 = vmatprep.subr.mxu0 %v309
    %516 = vmatpush1.msra.mxu0 %v308
    %517 = vmatprep.subr.mxu0 %v313
    %518 = vmatpush1.msra.mxu0 %v312
    %519 = vmatprep.subr.mxu0 %v317
    %520 = vmatpush1.msra.mxu0 %v316
    %521 = vmatprep.subr.mxu0 %v321
    %522 = vmatpush1.msra.mxu0 %v320
    %523 = vmatprep.subr.mxu0 %v325
    %524 = vmatpush1.msra.mxu0 %v324
    %525 = vmatprep.subr.mxu0 %v329
    %526 = vmatpush1.msra.mxu0 %v328
    %527 = vmatprep.subr.mxu0 %v333
    %528 = vmatpush1.msra.mxu0 %v332
    %529 = vmatprep.subr.mxu0 %v337
    %530 = vmatpush1.msra.mxu0 %v336
    %531 = vmatprep.subr.mxu0 %v341
    %532 = vmatpush1.msra.mxu0 %v340
    %533 = vmatprep.subr.mxu0 %v345
    %534 = vmatpush1.msra.mxu0 %v344
    %535 = vmatprep.subr.mxu0 %v349
    %536 = vmatpush1.msra.mxu0 %v348
    %537 = vmatprep.subr.mxu0 %v353
    %538 = vmatpush1.msra.mxu0 %v352
    %539 = vmatprep.subr.mxu0 %v357
    %540 = vmatpush1.msra.mxu0 %v356
    %541 = vmatprep.subr.mxu0 %v361
    %542 = vmatpush1.msra.mxu0 %v360
    %543 = vmatprep.subr.mxu0 %v365
    %544 = vmatpush1.msra.mxu0 %v364
    %545 = vmatprep.subr.mxu0 %v369
    %546 = vmatpush1.msra.mxu0 %v368
    %547 = vmatprep.subr.mxu0 %v373
    %548 = vmatpush1.msra.mxu0 %v372
    %549 = vmatprep.subr.mxu0 %v377
    %550 = vmatpush1.msra.mxu0 %v376
    %551 = vmatprep.subr.mxu0 %v381
    %552 = vmatpush1.msra.mxu0 %v380
    %553 = vmatprep.subr.mxu0 %v385
    %554 = vmatpush1.msra.mxu0 %v384
    %555 = vmatprep.subr.mxu0 %v389
    %556 = vmatpush1.msra.mxu0 %v388
    %557 = vmatprep.subr.mxu0 %v393
    %558 = vmatpush1.msra.mxu0 %v392
    %559 = vmatprep.subr.mxu0 %v397
    %560 = vmatpush1.msra.mxu0 %v396
    %561 = vmatprep.subr.mxu0 %v401
    %562 = vmatpush1.msra.mxu0 %v400
    %563 = vmatprep.subr.mxu0 %v405
    %564 = vmatpush1.msra.mxu0 %v404
    %565 = vmatprep.mubr.f32.mxu0 %v151
    %566 = vmatmul.mubr.f32.gmra.mrb[0].mxu0 %v150
    %v567 = vpop.f32.mrb[0].mxu0
    %v568 = vadd.f32 %v497, %v567
    %v569 = vpop.f32.mrb[0].mxu0
    %v570 = vadd.f32 %v499, %v569
    %571 = vdwg.mxu0
    %572 = vmatprep.subr.mxu0 %v155
    %573 = vmatpush1.msra.mxu0 %v154
    %574 = vmatprep.subr.mxu0 %v159
    %575 = vmatpush1.msra.mxu0 %v158
    %576 = vmatprep.subr.mxu0 %v163
    %577 = vmatpush1.msra.mxu0 %v162
    %578 = vmatprep.subr.mxu0 %v167
    %579 = vmatpush1.msra.mxu0 %v166
    %580 = vmatprep.subr.mxu0 %v171
    %581 = vmatpush1.msra.mxu0 %v170
    %582 = vmatprep.subr.mxu0 %v175
    %583 = vmatpush1.msra.mxu0 %v174
    %584 = vmatprep.subr.mxu0 %v179
    %585 = vmatpush1.msra.mxu0 %v178
    %586 = vmatprep.subr.mxu0 %v183
    %587 = vmatpush1.msra.mxu0 %v182
    %588 = vmatprep.subr.mxu0 %v187
    %589 = vmatpush1.msra.mxu0 %v186
    %590 = vmatprep.subr.mxu0 %v191
    %591 = vmatpush1.msra.mxu0 %v190
    %592 = vmatprep.subr.mxu0 %v195
    %593 = vmatpush1.msra.mxu0 %v194
    %594 = vmatprep.subr.mxu0 %v199
    %595 = vmatpush1.msra.mxu0 %v198
    %596 = vmatprep.subr.mxu0 %v203
    %597 = vmatpush1.msra.mxu0 %v202
    %598 = vmatprep.subr.mxu0 %v207
    %599 = vmatpush1.msra.mxu0 %v206
    %600 = vmatprep.subr.mxu0 %v211
    %601 = vmatpush1.msra.mxu0 %v210
    %602 = vmatprep.subr.mxu0 %v215
    %603 = vmatpush1.msra.mxu0 %v214
    %604 = vmatprep.subr.mxu0 %v219
    %605 = vmatpush1.msra.mxu0 %v218
    %606 = vmatprep.subr.mxu0 %v223
    %607 = vmatpush1.msra.mxu0 %v222
    %608 = vmatprep.subr.mxu0 %v227
    %609 = vmatpush1.msra.mxu0 %v226
    %610 = vmatprep.subr.mxu0 %v231
    %611 = vmatpush1.msra.mxu0 %v230
    %612 = vmatprep.subr.mxu0 %v235
    %613 = vmatpush1.msra.mxu0 %v234
    %614 = vmatprep.subr.mxu0 %v239
    %615 = vmatpush1.msra.mxu0 %v238
    %616 = vmatprep.subr.mxu0 %v243
    %617 = vmatpush1.msra.mxu0 %v242
    %618 = vmatprep.subr.mxu0 %v247
    %619 = vmatpush1.msra.mxu0 %v246
    %620 = vmatprep.subr.mxu0 %v251
    %621 = vmatpush1.msra.mxu0 %v250
    %622 = vmatprep.subr.mxu0 %v255
    %623 = vmatpush1.msra.mxu0 %v254
    %624 = vmatprep.subr.mxu0 %v259
    %625 = vmatpush1.msra.mxu0 %v258
    %626 = vmatprep.subr.mxu0 %v263
    %627 = vmatpush1.msra.mxu0 %v262
    %628 = vmatprep.subr.mxu0 %v267
    %629 = vmatpush1.msra.mxu0 %v266
    %630 = vmatprep.subr.mxu0 %v271
    %631 = vmatpush1.msra.mxu0 %v270
    %632 = vmatprep.subr.mxu0 %v275
    %633 = vmatpush1.msra.mxu0 %v274
    %634 = vmatprep.subr.mxu0 %v279
    %635 = vmatpush1.msra.mxu0 %v278
    %636 = vmatprep.mubr.f32.mxu0 %v149
    %637 = vmatmul.mubr.f32.gmra.mrb[0].mxu0 %v148
    %v638 = vpop.f32.mrb[0].mxu0
    %v639 = vadd.f32 %v421, %v638
    %v640 = vpop.f32.mrb[0].mxu0
    %v641 = vadd.f32 %v425, %v640
    %642 = vdwg.mxu0
    %643 = vmatprep.subr.mxu0 %v283
    %644 = vmatpush1.msra.mxu0 %v282
    %645 = vmatprep.subr.mxu0 %v287
    %646 = vmatpush1.msra.mxu0 %v286
    %647 = vmatprep.subr.mxu0 %v291
    %648 = vmatpush1.msra.mxu0 %v290
    %649 = vmatprep.subr.mxu0 %v295
    %650 = vmatpush1.msra.mxu0 %v294
    %651 = vmatprep.subr.mxu0 %v299
    %652 = vmatpush1.msra.mxu0 %v298
    %653 = vmatprep.subr.mxu0 %v303
    %654 = vmatpush1.msra.mxu0 %v302
    %655 = vmatprep.subr.mxu0 %v307
    %656 = vmatpush1.msra.mxu0 %v306
    %657 = vmatprep.subr.mxu0 %v311
    %658 = vmatpush1.msra.mxu0 %v310
    %659 = vmatprep.subr.mxu0 %v315
    %660 = vmatpush1.msra.mxu0 %v314
    %661 = vmatprep.subr.mxu0 %v319
    %662 = vmatpush1.msra.mxu0 %v318
    %663 = vmatprep.subr.mxu0 %v323
    %664 = vmatpush1.msra.mxu0 %v322
    %665 = vmatprep.subr.mxu0 %v327
    %666 = vmatpush1.msra.mxu0 %v326
    %667 = vmatprep.subr.mxu0 %v331
    %668 = vmatpush1.msra.mxu0 %v330
    %669 = vmatprep.subr.mxu0 %v335
    %670 = vmatpush1.msra.mxu0 %v334
    %671 = vmatprep.subr.mxu0 %v339
    %672 = vmatpush1.msra.mxu0 %v338
    %673 = vmatprep.subr.mxu0 %v343
    %674 = vmatpush1.msra.mxu0 %v342
    %675 = vmatprep.subr.mxu0 %v347
    %676 = vmatpush1.msra.mxu0 %v346
    %677 = vmatprep.subr.mxu0 %v351
    %678 = vmatpush1.msra.mxu0 %v350
    %679 = vmatprep.subr.mxu0 %v355
    %680 = vmatpush1.msra.mxu0 %v354
    %681 = vmatprep.subr.mxu0 %v359
    %682 = vmatpush1.msra.mxu0 %v358
    %683 = vmatprep.subr.mxu0 %v363
    %684 = vmatpush1.msra.mxu0 %v362
    %685 = vmatprep.subr.mxu0 %v367
    %686 = vmatpush1.msra.mxu0 %v366
    %687 = vmatprep.subr.mxu0 %v371
    %688 = vmatpush1.msra.mxu0 %v370
    %689 = vmatprep.subr.mxu0 %v375
    %690 = vmatpush1.msra.mxu0 %v374
    %691 = vmatprep.subr.mxu0 %v379
    %692 = vmatpush1.msra.mxu0 %v378
    %693 = vmatprep.subr.mxu0 %v383
    %694 = vmatpush1.msra.mxu0 %v382
    %695 = vmatprep.subr.mxu0 %v387
    %696 = vmatpush1.msra.mxu0 %v386
    %697 = vmatprep.subr.mxu0 %v391
    %698 = vmatpush1.msra.mxu0 %v390
    %699 = vmatprep.subr.mxu0 %v395
    %700 = vmatpush1.msra.mxu0 %v394
    %701 = vmatprep.subr.mxu0 %v399
    %702 = vmatpush1.msra.mxu0 %v398
    %703 = vmatprep.subr.mxu0 %v403
    %704 = vmatpush1.msra.mxu0 %v402
    %705 = vmatprep.subr.mxu0 %v407
    %706 = vmatpush1.msra.mxu0 %v406
    %707 = vmatprep.mubr.f32.mxu0 %v151
    %708 = vmatmul.mubr.f32.gmra.mrb[0].mxu0 %v150
    %v709 = vpop.f32.mrb[0].mxu0
    %v710 = vadd.f32 %v639, %v709
    %v711 = vpop.f32.mrb[0].mxu0
    %v712 = vadd.f32 %v641, %v711
    %713 = vdwg.mxu0
    %v714 = vmax.f32 %v568, 0.0
    %v715 = vmax.f32 %v570, 0.0
    %v716 = vmax.f32 %v710, 0.0
    %v717 = vmax.f32 %v712, 0.0
    %v718 = vld [vmem:[#allocation5] sm:$0xff]
    %v719 = vld [vmem:[#allocation5 + $0x8] sm:$0xff]
    %v720 = vld [vmem:[#allocation5 + $0x10] sm:$0xff]
    %v721 = vld [vmem:[#allocation5 + $0x18] sm:$0xff]
    %v722 = vld [vmem:[#allocation5 + $0x20] sm:$0xff]
    %v723 = vld [vmem:[#allocation5 + $0x28] sm:$0xff]
    %v724 = vld [vmem:[#allocation5 + $0x30] sm:$0xff]
    %v725 = vld [vmem:[#allocation5 + $0x38] sm:$0xff]
    %v726 = vld [vmem:[#allocation5 + $0x40] sm:$0xff]
    %v727 = vld [vmem:[#allocation5 + $0x48] sm:$0xff]
    %v728 = vld [vmem:[#allocation5 + $0x50] sm:$0xff]
    %v729 = vld [vmem:[#allocation5 + $0x58] sm:$0xff]
    %v730 = vld [vmem:[#allocation5 + $0x60] sm:$0xff]
    %v731 = vld [vmem:[#allocation5 + $0x68] sm:$0xff]
    %v732 = vld [vmem:[#allocation5 + $0x70] sm:$0xff]
    %v733 = vld [vmem:[#allocation5 + $0x78] sm:$0xff]
    %v734 = vld [vmem:[#allocation5 + $0x80] sm:$0xff]
    %v735 = vld [vmem:[#allocation5 + $0x88] sm:$0xff]
    %v736 = vld [vmem:[#allocation5 + $0x90] sm:$0xff]
    %v737 = vld [vmem:[#allocation5 + $0x98] sm:$0xff]
    %v738 = vld [vmem:[#allocation5 + $0xa0] sm:$0xff]
    %v739 = vld [vmem:[#allocation5 + $0xa8] sm:$0xff]
    %v740 = vld [vmem:[#allocation5 + $0xb0] sm:$0xff]
    %v741 = vld [vmem:[#allocation5 + $0xb8] sm:$0xff]
    %v742 = vld [vmem:[#allocation5 + $0xc0] sm:$0xff]
    %v743 = vld [vmem:[#allocation5 + $0xc8] sm:$0xff]
    %v744 = vld [vmem:[#allocation5 + $0xd0] sm:$0xff]
    %v745 = vld [vmem:[#allocation5 + $0xd8] sm:$0xff]
    %v746 = vld [vmem:[#allocation5 + $0xe0] sm:$0xff]
    %v747 = vld [vmem:[#allocation5 + $0xe8] sm:$0xff]
    %v748 = vld [vmem:[#allocation5 + $0xf0] sm:$0xff]
    %v749 = vld [vmem:[#allocation5 + $0xf8] sm:$0xff]
    %v750 = vld [vmem:[#allocation5 + $0x100] sm:$0xff]
    %v751 = vld [vmem:[#allocation5 + $0x108] sm:$0xff]
    %v752 = vld [vmem:[#allocation5 + $0x110] sm:$0xff]
    %v753 = vld [vmem:[#allocation5 + $0x118] sm:$0xff]
    %v754 = vld [vmem:[#allocation5 + $0x120] sm:$0xff]
    %v755 = vld [vmem:[#allocation5 + $0x128] sm:$0xff]
    %v756 = vld [vmem:[#allocation5 + $0x130] sm:$0xff]
    %v757 = vld [vmem:[#allocation5 + $0x138] sm:$0xff]
    %v758 = vld [vmem:[#allocation5 + $0x140] sm:$0xff]
    %v759 = vld [vmem:[#allocation5 + $0x148] sm:$0xff]
    %v760 = vld [vmem:[#allocation5 + $0x150] sm:$0xff]
    %v761 = vld [vmem:[#allocation5 + $0x158] sm:$0xff]
    %v762 = vld [vmem:[#allocation5 + $0x160] sm:$0xff]
    %v763 = vld [vmem:[#allocation5 + $0x168] sm:$0xff]
    %v764 = vld [vmem:[#allocation5 + $0x170] sm:$0xff]
    %v765 = vld [vmem:[#allocation5 + $0x178] sm:$0xff]
    %v766 = vld [vmem:[#allocation5 + $0x180] sm:$0xff]
    %v767 = vld [vmem:[#allocation5 + $0x188] sm:$0xff]
    %v768 = vld [vmem:[#allocation5 + $0x190] sm:$0xff]
    %v769 = vld [vmem:[#allocation5 + $0x198] sm:$0xff]
    %v770 = vld [vmem:[#allocation5 + $0x1a0] sm:$0xff]
    %v771 = vld [vmem:[#allocation5 + $0x1a8] sm:$0xff]
    %v772 = vld [vmem:[#allocation5 + $0x1b0] sm:$0xff]
    %v773 = vld [vmem:[#allocation5 + $0x1b8] sm:$0xff]
    %v774 = vld [vmem:[#allocation5 + $0x1c0] sm:$0xff]
    %v775 = vld [vmem:[#allocation5 + $0x1c8] sm:$0xff]
    %v776 = vld [vmem:[#allocation5 + $0x1d0] sm:$0xff]
    %v777 = vld [vmem:[#allocation5 + $0x1d8] sm:$0xff]
    %v778 = vld [vmem:[#allocation5 + $0x1e0] sm:$0xff]
    %v779 = vld [vmem:[#allocation5 + $0x1e8] sm:$0xff]
    %v780 = vld [vmem:[#allocation5 + $0x1f0] sm:$0xff]
    %v781 = vld [vmem:[#allocation5 + $0x1f8] sm:$0xff]
    %v782 = vld [vmem:[%s6] sm:$0x1]
    %v784 = vlaneseq
    %v785 = vshrl.u32 %v784, 7
    %v786 = vsub.s32 0, %v785
    %v787 = vrot.slane %v782, %v786
    %789 = vmatprep.subr.mxu0 0.0
    %790 = vmatpush1.msra.mxu0 %v718
    %791 = vmatprep.subr.mxu0 0.0
    %792 = vmatpush1.msra.mxu0 %v719
    %793 = vmatprep.subr.mxu0 0.0
    %794 = vmatpush1.msra.mxu0 %v720
    %795 = vmatprep.subr.mxu0 0.0
    %796 = vmatpush1.msra.mxu0 %v721
    %797 = vmatprep.subr.mxu0 0.0
    %798 = vmatpush1.msra.mxu0 %v722
    %799 = vmatprep.subr.mxu0 0.0
    %800 = vmatpush1.msra.mxu0 %v723
    %801 = vmatprep.subr.mxu0 0.0
    %802 = vmatpush1.msra.mxu0 %v724
    %803 = vmatprep.subr.mxu0 0.0
    %804 = vmatpush1.msra.mxu0 %v725
    %805 = vmatprep.subr.mxu0 0.0
    %806 = vmatpush1.msra.mxu0 %v726
    %807 = vmatprep.subr.mxu0 0.0
    %808 = vmatpush1.msra.mxu0 %v727
    %809 = vmatprep.subr.mxu0 0.0
    %810 = vmatpush1.msra.mxu0 %v728
    %811 = vmatprep.subr.mxu0 0.0
    %812 = vmatpush1.msra.mxu0 %v729
    %813 = vmatprep.subr.mxu0 0.0
    %814 = vmatpush1.msra.mxu0 %v730
    %815 = vmatprep.subr.mxu0 0.0
    %816 = vmatpush1.msra.mxu0 %v731
    %817 = vmatprep.subr.mxu0 0.0
    %818 = vmatpush1.msra.mxu0 %v732
    %819 = vmatprep.subr.mxu0 0.0
    %820 = vmatpush1.msra.mxu0 %v733
    %821 = vmatprep.subr.mxu0 0.0
    %822 = vmatpush1.msra.mxu0 %v734
    %823 = vmatprep.subr.mxu0 0.0
    %824 = vmatpush1.msra.mxu0 %v735
    %825 = vmatprep.subr.mxu0 0.0
    %826 = vmatpush1.msra.mxu0 %v736
    %827 = vmatprep.subr.mxu0 0.0
    %828 = vmatpush1.msra.mxu0 %v737
    %829 = vmatprep.subr.mxu0 0.0
    %830 = vmatpush1.msra.mxu0 %v738
    %831 = vmatprep.subr.mxu0 0.0
    %832 = vmatpush1.msra.mxu0 %v739
    %833 = vmatprep.subr.mxu0 0.0
    %834 = vmatpush1.msra.mxu0 %v740
    %835 = vmatprep.subr.mxu0 0.0
    %836 = vmatpush1.msra.mxu0 %v741
    %837 = vmatprep.subr.mxu0 0.0
    %838 = vmatpush1.msra.mxu0 %v742
    %839 = vmatprep.subr.mxu0 0.0
    %840 = vmatpush1.msra.mxu0 %v743
    %841 = vmatprep.subr.mxu0 0.0
    %842 = vmatpush1.msra.mxu0 %v744
    %843 = vmatprep.subr.mxu0 0.0
    %844 = vmatpush1.msra.mxu0 %v745
    %845 = vmatprep.subr.mxu0 0.0
    %846 = vmatpush1.msra.mxu0 %v746
    %847 = vmatprep.subr.mxu0 0.0
    %848 = vmatpush1.msra.mxu0 %v747
    %849 = vmatprep.subr.mxu0 0.0
    %850 = vmatpush1.msra.mxu0 %v748
    %851 = vmatprep.subr.mxu0 0.0
    %852 = vmatpush1.msra.mxu0 %v749
    %853 = vmatprep.mubr.f32.mxu0 %v715
    %854 = vmatmul.mubr.f32.gmra.mrb[0].mxu0 %v714
    %v855 = vpop.f32.mrb[0].mxu0
    %v856 = vadd.f32 %v787, %v855
    %v857 = vpop.f32.mrb[0].mxu0
    %858 = vdwg.mxu0
    %859 = vmatprep.subr.mxu0 0.0
    %860 = vmatpush1.msra.mxu0 %v750
    %861 = vmatprep.subr.mxu0 0.0
    %862 = vmatpush1.msra.mxu0 %v751
    %863 = vmatprep.subr.mxu0 0.0
    %864 = vmatpush1.msra.mxu0 %v752
    %865 = vmatprep.subr.mxu0 0.0
    %866 = vmatpush1.msra.mxu0 %v753
    %867 = vmatprep.subr.mxu0 0.0
    %868 = vmatpush1.msra.mxu0 %v754
    %869 = vmatprep.subr.mxu0 0.0
    %870 = vmatpush1.msra.mxu0 %v755
    %871 = vmatprep.subr.mxu0 0.0
    %872 = vmatpush1.msra.mxu0 %v756
    %873 = vmatprep.subr.mxu0 0.0
    %874 = vmatpush1.msra.mxu0 %v757
    %875 = vmatprep.subr.mxu0 0.0
    %876 = vmatpush1.msra.mxu0 %v758
    %877 = vmatprep.subr.mxu0 0.0
    %878 = vmatpush1.msra.mxu0 %v759
    %879 = vmatprep.subr.mxu0 0.0
    %880 = vmatpush1.msra.mxu0 %v760
    %881 = vmatprep.subr.mxu0 0.0
    %882 = vmatpush1.msra.mxu0 %v761
    %883 = vmatprep.subr.mxu0 0.0
    %884 = vmatpush1.msra.mxu0 %v762
    %885 = vmatprep.subr.mxu0 0.0
    %886 = vmatpush1.msra.mxu0 %v763
    %887 = vmatprep.subr.mxu0 0.0
    %888 = vmatpush1.msra.mxu0 %v764
    %889 = vmatprep.subr.mxu0 0.0
    %890 = vmatpush1.msra.mxu0 %v765
    %891 = vmatprep.subr.mxu0 0.0
    %892 = vmatpush1.msra.mxu0 %v766
    %893 = vmatprep.subr.mxu0 0.0
    %894 = vmatpush1.msra.mxu0 %v767
    %895 = vmatprep.subr.mxu0 0.0
    %896 = vmatpush1.msra.mxu0 %v768
    %897 = vmatprep.subr.mxu0 0.0
    %898 = vmatpush1.msra.mxu0 %v769
    %899 = vmatprep.subr.mxu0 0.0
    %900 = vmatpush1.msra.mxu0 %v770
    %901 = vmatprep.subr.mxu0 0.0
    %902 = vmatpush1.msra.mxu0 %v771
    %903 = vmatprep.subr.mxu0 0.0
    %904 = vmatpush1.msra.mxu0 %v772
    %905 = vmatprep.subr.mxu0 0.0
    %906 = vmatpush1.msra.mxu0 %v773
    %907 = vmatprep.subr.mxu0 0.0
    %908 = vmatpush1.msra.mxu0 %v774
    %909 = vmatprep.subr.mxu0 0.0
    %910 = vmatpush1.msra.mxu0 %v775
    %911 = vmatprep.subr.mxu0 0.0
    %912 = vmatpush1.msra.mxu0 %v776
    %913 = vmatprep.subr.mxu0 0.0
    %914 = vmatpush1.msra.mxu0 %v777
    %915 = vmatprep.subr.mxu0 0.0
    %916 = vmatpush1.msra.mxu0 %v778
    %917 = vmatprep.subr.mxu0 0.0
    %918 = vmatpush1.msra.mxu0 %v779
    %919 = vmatprep.subr.mxu0 0.0
    %920 = vmatpush1.msra.mxu0 %v780
    %921 = vmatprep.subr.mxu0 0.0
    %922 = vmatpush1.msra.mxu0 %v781
    %923 = vmatprep.mubr.f32.mxu0 %v717
    %924 = vmatmul.mubr.f32.gmra.mrb[0].mxu0 %v716
    %v925 = vpop.f32.mrb[0].mxu0
    %v926 = vadd.f32 %v856, %v925
    %v927 = vpop.f32.mrb[0].mxu0
    %928 = vdwg.mxu0
    %929 = vst [vmem:[#allocation7] sm:$0xff] %v926
    // Predicated region
    $region38: #{tpu_custom_call.1} parent=1 // pred_check
      _
    $region39: #{tpu_custom_call.1} parent=1 // pred_check_branch
      %931 = sbr.rel (0) target = $region41
    $region40: #{tpu_custom_call.1} parent=1 // pred_region
      %s933 = ssub.s32 128, 128
      %934 = vsyncadd [#allocation4], %s933
      %s936 = sshll.u32 [#allocation7], 4
      %s937 = int_to_ptr.vmem [resolvable:$true] %s936
      %939 = dma.vmem_to_hbm [thread:$0]  %s937, 128, %s7, [#allocation4]
    $region41: #{tpu_custom_call.1} parent=1 // pred_fallthru
      _
    // Predicated region
    $region42: #{tpu_custom_call.1} parent=1 // pred_check
      _
    $region43: #{tpu_custom_call.1} parent=1 // pred_check_branch
      %941 = sbr.rel (0) target = $region45
    $region44: #{tpu_custom_call.1} parent=1 // pred_region
      %942 = dma.done [#allocation4], 128
    $region45: #{tpu_custom_call.1} parent=1 // pred_fallthru
      _
    %943 = vsyncpa [#allocation3], 1
    %944 = vsyncpa [#allocation6], 1
    %945 = vsyncpa [#allocation4], 1

</llo_original>
